<compile_context>
chip_gen: v5e
topology: v5e:2x2
jax: 0.10.0
libtpu: 0.0.40
codegen_flags: <defaults>
</compile_context>

<pallas_src>
import functools

import jax
import jax.numpy as jnp
from jax.experimental import pallas as pl
from jax.experimental.pallas import tpu as pltpu

IN = 10
IN_PAD = 16    # contraction dim padded to a sublane multiple (8)
OUT = 5
OUT_PAD = 128  # lane-dense output width


def _linear_kernel(x_ref, w_ref, b_ref, o_ref):
    # x_ref: [B, IN_PAD], w_ref: [IN_PAD, OUT_PAD] (MXU-native [K, N]),
    # b_ref: [1, OUT_PAD], o_ref: [B, OUT_PAD]
    acc = jnp.dot(x_ref[...], w_ref[...], preferred_element_type=jnp.float32)
    o_ref[...] = (acc + b_ref[...]).astype(o_ref.dtype)


def prepare_linear_params(weight, bias):
    """One-time (init-time) layout prep of nn.Linear parameters.

    weight: [OUT, IN] float32 (PyTorch nn.Linear layout)
    bias:   [OUT]     float32
    returns (w_pad [IN_PAD, OUT_PAD], b_pad [1, OUT_PAD])

    The weight is transposed + zero-padded into the MXU-native [K, N] layout:
    two fully lane-dense (8,128) tiles, dense HBM->VMEM DMA, canonical RHS feed
    (no per-call relayout / transposed-RHS handling).
    """
    out, in_dim = weight.shape
    w_pad = (
        jnp.zeros((IN_PAD, OUT_PAD), dtype=weight.dtype)
        .at[:in_dim, :out]
        .set(weight.T)
    )
    b_pad = jnp.zeros((1, OUT_PAD), dtype=bias.dtype).at[0, :out].set(bias)
    return w_pad, b_pad


@functools.partial(jax.jit, static_argnames=("out_features",))
def linear_pallas(x, w_pad, b_pad, out_features=OUT):
    """y = x @ weight.T + bias (nn.Linear semantics) via a gridless Pallas kernel.

    x:     [B, IN]           float32
    w_pad: [IN_PAD, OUT_PAD] float32 (padded/transposed once at init)
    b_pad: [1, OUT_PAD]      float32 (padded once at init)
    returns [B, out_features] float32
    """
    B, in_dim = x.shape
    # Zero-pad the contraction dim to IN_PAD. Exact: weight rows >= in_dim are
    # zero. Tiny XLA op, fuses with surrounding computation.
    x_pad = jnp.pad(x, ((0, 0), (0, IN_PAD - in_dim)))

    # NOTE: flops/bytes describe the PADDED compute actually performed
    # (K=IN_PAD, N=OUT_PAD) -- intentionally larger than the logical 10->5 GEMM
    # so it stays consistent with bytes_accessed.
    cost = pl.CostEstimate(
        flops=2 * B * IN_PAD * OUT_PAD,
        transcendentals=0,
        bytes_accessed=4 * (B * IN_PAD + IN_PAD * OUT_PAD + OUT_PAD + B * OUT_PAD),
    )

    y_slab = pl.pallas_call(
        _linear_kernel,
        out_shape=jax.ShapeDtypeStruct((B, OUT_PAD), x.dtype),
        in_specs=[
            pl.BlockSpec(memory_space=pltpu.MemorySpace.VMEM),
            pl.BlockSpec(memory_space=pltpu.MemorySpace.VMEM),
            pl.BlockSpec(memory_space=pltpu.MemorySpace.VMEM),
        ],
        out_specs=pl.BlockSpec(memory_space=pltpu.MemorySpace.VMEM),
        cost_estimate=cost,
    )(x_pad, w_pad, b_pad)

    # Kernel stores a lane-dense 128-wide slab (unmasked vst fast path); the
    # logical output width is recovered by this tiny slice, which fuses into
    # any downstream consumer.
    return y_slab[:, :out_features]


if __name__ == "__main__":
    key = jax.random.PRNGKey(0)
    k_x, k_w, k_b = jax.random.split(key, 3)

    B = 8

    # Deterministic inputs/params (synthetic; mirrors nn.Linear(10, 5) shapes).
    x = jax.random.normal(k_x, (B, IN), dtype=jnp.float32)
    weight = jax.random.normal(k_w, (OUT, IN), dtype=jnp.float32) * 0.1
    bias = jax.random.normal(k_b, (OUT,), dtype=jnp.float32) * 0.1

    # One-time parameter preparation (padding / layout), outside the hot path.
    w_pad, b_pad = prepare_linear_params(weight, bias)

    y = linear_pallas(x, w_pad, b_pad)
    y = jax.block_until_ready(y)

    # Reference check against plain JAX (nn.Linear semantics).
    y_ref = x @ weight.T + bias
    assert y.shape == (B, OUT)
    assert jnp.allclose(y, y_ref, atol=1e-5, rtol=1e-5)

    print("KERNEL_OK")
</pallas_src>

<mosaic_0001>
module attributes {stable_mosaic.version = 11 : i64} {
  func.func @_linear_kernel(%arg0: memref<8x16xf32, #tpu.memory_space<vmem>>, %arg1: memref<16x128xf32, #tpu.memory_space<vmem>>, %arg2: memref<1x128xf32, #tpu.memory_space<vmem>>, %arg3: memref<8x128xf32, #tpu.memory_space<vmem>>) attributes {dimension_semantics = [], scalar_prefetch = 0 : i64, scratch_operands = 0 : i64, tpu.core_type = #tpu.core_type<tc>} {
    %c0 = arith.constant 0 : index
    %c0_0 = arith.constant 0 : index
    %0 = vector.load %arg0[%c0, %c0_0] : memref<8x16xf32, #tpu.memory_space<vmem>>, vector<8x16xf32>
    %c0_1 = arith.constant 0 : index
    %c0_2 = arith.constant 0 : index
    %1 = vector.load %arg1[%c0_1, %c0_2] : memref<16x128xf32, #tpu.memory_space<vmem>>, vector<16x128xf32>
    %cst = arith.constant dense<0.000000e+00> : vector<8x128xf32>
    %2 = tpu.matmul %0, %1, %cst {dimension_numbers = #tpu.dot_dimension_numbers<[1], [0], [0], [1], [0, 0, 1, 1], [], []>} : vector<8x16xf32>, vector<16x128xf32>, vector<8x128xf32> -> vector<8x128xf32>
    %c0_3 = arith.constant 0 : index
    %c0_4 = arith.constant 0 : index
    %3 = vector.load %arg2[%c0_3, %c0_4] : memref<1x128xf32, #tpu.memory_space<vmem>>, vector<1x128xf32>
    %4 = vector.broadcast %3 : vector<1x128xf32> to vector<8x128xf32>
    %5 = arith.addf %2, %4 : vector<8x128xf32>
    %c0_5 = arith.constant 0 : index
    %c0_6 = arith.constant 0 : index
    %6 = vector.load %arg3[%c0_5, %c0_6] : memref<8x128xf32, #tpu.memory_space<vmem>>, vector<8x128xf32>
    tpu.vector_store %arg3[%c0_5, %c0_6], %5 {strides = array<i32>} : memref<8x128xf32, #tpu.memory_space<vmem>>, vector<8x128xf32>,
    return
  }
}

</mosaic_0001>

<llo_original>
// kernel: linear_pallas.1
$region0: #{linear_pallas.1}
  #allocation0 [shape = 'u32[]', space=smem, size = 0x4, offset = 0x4, fixed_abs, tag = 'smem constant byte address 0x4 - core index']
  #allocation1 [shape = 'u32[72,128]{1,0:T(1,128)}', space=vmem, size = 0x9000, scoped, tag = 'internal scratch']
  %s0 = inlined_call_operand.vmem [shape: f32[8,16], index: 0, kind: input, shape index: {}]
  %s1 = inlined_call_operand.vmem [shape: f32[16,128], index: 1, kind: input, shape index: {}]
  %s2 = inlined_call_operand.vmem [shape: f32[1,128], index: 2, kind: input, shape index: {}]
  %s3 = inlined_call_operand.hbm [shape: f32[8,128], index: 3, kind: output, shape index: {}]
  %s4 = sld [smem:[#allocation0]]
  $region22: #{linear_pallas.1} parent=0
    _
  %s6 = ssub.s32 1, %s4
  %s7 = scalar_select 0, %s6, %s4
  $region1: #{linear_pallas.1} parent=0
    #allocation2 [shape = 'u8[4096]{0}', space=vmem, size = 0x1000, scoped, tag = 'output window, operand 0, single buffered']
    #allocation3 [shape = 's32[1]{0}', space=sflag, size = 0x4, scoped, tag = 'scoped memory for linear_pallas.1']
    %8 = vsyncpa [#allocation3], 0
    // Predicated region
    $region2: #{linear_pallas.1} parent=1 // pred_check
      _
    $region3: #{linear_pallas.1} parent=1 // pred_check_branch
      %10 = sbr.rel (0) target = $region5
    $region4: #{linear_pallas.1} parent=1 // pred_region
      _
    $region5: #{linear_pallas.1} parent=1 // pred_fallthru
      _
    // Predicated region
    $region6: #{linear_pallas.1} parent=1 // pred_check
      _
    $region7: #{linear_pallas.1} parent=1 // pred_check_branch
      %12 = sbr.rel (0) target = $region9
    $region8: #{linear_pallas.1} parent=1 // pred_region
      _
    $region9: #{linear_pallas.1} parent=1 // pred_fallthru
      _
    // Predicated region
    $region10: #{linear_pallas.1} parent=1 // pred_check
      _
    $region11: #{linear_pallas.1} parent=1 // pred_check_branch
      %14 = sbr.rel (0) target = $region13
    $region12: #{linear_pallas.1} parent=1 // pred_region
      _
    $region13: #{linear_pallas.1} parent=1 // pred_fallthru
      _
    %v15 = vld [vmem:[%s0] sm:$0xff]
    %v16 = vld [vmem:[%s1] sm:$0xff]
    %v17 = vld [vmem:[%s1 + $0x8] sm:$0xff]
    %v18 = vld [vmem:[%s2] sm:$0x1]
    %v20 = vperm.slane %v18, 0
    %vm22 = vcmask 130048
    %v24 = vsel %vm22, %v15, 0
    %26 = vmatpush.msra.mxu0 0.0
    %27 = vmatpush.msra.mxu0 0.0
    %28 = vmatpush.msra.mxu0 0.0
    %29 = vmatpush.msra.mxu0 0.0
    %30 = vmatpush.msra.mxu0 0.0
    %31 = vmatpush.msra.mxu0 0.0
    %32 = vmatpush.msra.mxu0 0.0
    %33 = vmatpush.msra.mxu0 0.0
    %34 = vmatpush.msra.mxu0 0.0
    %35 = vmatpush.msra.mxu0 0.0
    %36 = vmatpush.msra.mxu0 0.0
    %37 = vmatpush.msra.mxu0 0.0
    %38 = vmatpush.msra.mxu0 0.0
    %39 = vmatpush.msra.mxu0 0.0
    %40 = vmatpush.msra.mxu0 %v17
    %41 = vmatpush.msra.mxu0 %v16
    %42 = vmatmul.f32.gmra.mxu0 %v24
    %v43 = vpop.f32.mrf.mxu0
    %v44 = vadd.f32 %v20, %v43
    %45 = vdwg.mxu0
    %46 = vst [vmem:[#allocation2] sm:$0xff] %v44
    // Predicated region
    $region14: #{linear_pallas.1} parent=1 // pred_check
      _
    $region15: #{linear_pallas.1} parent=1 // pred_check_branch
      %48 = sbr.rel (0) target = $region17
    $region16: #{linear_pallas.1} parent=1 // pred_region
      %50 = vsyncadd [#allocation3], 0
      %s52 = sshll.u32 [#allocation2], 4
      %s53 = int_to_ptr.vmem [resolvable:$true] %s52
      %s54 = sshll.u32 %s3, 4
      %s55 = int_to_ptr.hbm [resolvable:$true] %s54
      %57 = dma.vmem_to_hbm [thread:$0]  %s53, 128, %s55, [#allocation3]
    $region17: #{linear_pallas.1} parent=1 // pred_fallthru
      _
    // Predicated region
    $region18: #{linear_pallas.1} parent=1 // pred_check
      _
    $region19: #{linear_pallas.1} parent=1 // pred_check_branch
      %59 = sbr.rel (0) target = $region21
    $region20: #{linear_pallas.1} parent=1 // pred_region
      %61 = dma.done [#allocation3], 128
    $region21: #{linear_pallas.1} parent=1 // pred_fallthru
      _
    %62 = vsyncpa [#allocation3], 1

</llo_original>
